<compile_context>
chip_gen: v6e
topology: v6e:2x2x1
jax: 0.10.0
libtpu: 0.0.40
codegen_flags: <defaults>
</compile_context>

<pallas_src>
import functools

import jax
import jax.numpy as jnp
from jax.experimental import pallas as pl
from jax.experimental.pallas import tpu as pltpu


_LANE_WIDE = 1024                 # slab lane width for non-tiny inputs (8 vregs wide)
_LANE_MIN = 128                   # minimum full-vreg lane width
_TILE_BYTES = 4 * 1024 * 1024     # target bytes per pipeline buffer (~roofline plateau)
_MIN_PALLAS_BYTES = 256 * 1024    # below this, plain fused XLA elementwise wins
_MIN_SPLIT_TILE_BYTES = 1 << 20   # only split for multi-TC if each tile >= 1 MiB


def _round_up(a, b):
    return ((a + b - 1) // b) * b


def _num_tensorcores():
    """Best-effort TensorCores-per-chip (2 on v7x, 1 on v5e/v6e). Defaults to 1."""
    try:
        info_fn = getattr(pltpu, "get_tpu_info", None)
        if info_fn is None:
            return 1
        info = info_fn()
    except Exception:
        return 1
    for attr in ("num_tensorcores", "tensorcores_per_chip", "num_cores",
                 "cores_per_chip"):
        n = getattr(info, attr, None)
        if isinstance(n, int) and n > 0:
            return n
    return 1


def _prediction_kernel(x_ref, bias_ref, o_ref, *, task, use_bias):
    """Elementwise hot path: out = sigmoid(x + bias) (or bias-add / sigmoid only)."""
    out = x_ref[...].astype(jnp.float32)      # f32 math (v5e has no bf16 VPU/EUP)
    if use_bias:
        out = out + bias_ref[0]               # scalar bias broadcast from SMEM
    if task == 'binary':
        out = jax.nn.sigmoid(out)             # exp on EUP slot, no explicit VPU divide
    o_ref[...] = out.astype(o_ref.dtype)


def prediction_layer(x, bias=None, *, task='binary', use_bias=True,
                     min_pallas_bytes=_MIN_PALLAS_BYTES):
    """Pallas implementation of PredictionLayer.forward.

    x:    arbitrary-shape float array of logits (PyTorch module uses (B, 1))
    bias: (1,) float array (the nn.Parameter from __init__); ignored if use_bias=False
    """
    if task not in ('binary', 'multiclass', 'regression'):
        raise ValueError('task must be binary,multiclass or regression')

    # Identity fast path: no bias and no sigmoid -> nothing to compute at all.
    if not use_bias and task != 'binary':
        return x

    if bias is None:
        bias = jnp.zeros((1,), dtype=jnp.float32)
    bias = jnp.asarray(bias, dtype=jnp.float32).reshape((1,))

    orig_shape = x.shape
    orig_dtype = x.dtype
    total = x.size
    itemsize = jnp.dtype(orig_dtype).itemsize

    # ---- Tiny-input fast path: let XLA fuse a single elementwise op -------------
    # The real module input is a (B,1) logit column; the pallas_call/layout overhead
    # would dominate.  Same math (f32) as the kernel for consistent numerics.
    if total * itemsize < min_pallas_bytes:
        out = x.astype(jnp.float32)
        if use_bias:
            out = out + bias[0]
        if task == 'binary':
            out = jax.nn.sigmoid(out)
        return out.astype(orig_dtype)

    # ---- Lane-dense slab layout (pure layout plumbing for an elementwise op) ----
    W = _LANE_WIDE if total >= _LANE_WIDE else _LANE_MIN
    rows = pl.cdiv(total, W)

    flat = x.reshape(-1)
    pad = rows * W - total
    if pad:  # only pay the extra pad/slice round trip for truly ragged sizes
        flat = jnp.pad(flat, (0, pad))
    slab = flat.reshape(rows, W)

    # Constant-byte tiles (~4 MiB per pipeline buffer), rows a multiple of 8
    # unless the block covers the full array (always legal).
    target_rows = max(8, (_TILE_BYTES // (W * itemsize)) // 8 * 8)
    ncores = _num_tensorcores()

    if rows <= target_rows:
        block_rows = rows                               # one full-array block
        if ncores > 1 and rows >= 2 * 8:
            half = _round_up(pl.cdiv(rows, ncores), 8)  # split across v7x's 2 TCs
            if half * W * itemsize >= _MIN_SPLIT_TILE_BYTES:
                block_rows = half
    else:
        block_rows = target_rows
        if ncores > 1:
            nsteps = pl.cdiv(rows, block_rows)
            if nsteps % ncores:                         # balance grid over the TCs
                nsteps_even = _round_up(nsteps, ncores)
                block_rows = _round_up(pl.cdiv(rows, nsteps_even), 8)

    grid = (pl.cdiv(rows, block_rows),)                 # ragged last block is fine

    # VMEM actually needed: double-buffered in + out tiles, plus slack.
    block_bytes = block_rows * W * itemsize
    vmem_limit = int(min(max(4 * block_bytes + (4 << 20), 16 << 20), 48 << 20))

    kernel = functools.partial(_prediction_kernel, task=task, use_bias=use_bias)

    out_slab = pl.pallas_call(
        kernel,
        out_shape=jax.ShapeDtypeStruct((rows, W), orig_dtype),
        grid_spec=pltpu.PrefetchScalarGridSpec(
            num_scalar_prefetch=0,
            grid=grid,
            in_specs=[
                pl.BlockSpec((block_rows, W), lambda i: (i, 0)),       # logits tile
                pl.BlockSpec(memory_space=pltpu.MemorySpace.SMEM),     # scalar bias
            ],
            out_specs=pl.BlockSpec((block_rows, W), lambda i: (i, 0)),
        ),
        compiler_params=pltpu.CompilerParams(
            dimension_semantics=("parallel",),
            vmem_limit_bytes=vmem_limit,
        ),
    )(slab, bias)

    out = out_slab.reshape(-1)
    if pad:
        out = out[:total]
    return out.reshape(orig_shape)


if __name__ == "__main__":
    key = jax.random.PRNGKey(0)
    k1, k2, k3, k4 = jax.random.split(key, 4)

    bias = jnp.zeros((1,), dtype=jnp.float32)   # nn.Parameter(torch.zeros((1,)))

    # --- Test 1: real module shape — (batch, 1) logit column (tiny-input XLA path) ---
    x1 = jax.random.normal(k1, (16, 1), dtype=jnp.float32)
    out1 = jax.block_until_ready(prediction_layer(x1, bias, task='binary', use_bias=True))
    ref1 = jax.nn.sigmoid(x1 + bias[0])
    assert out1.shape == x1.shape and out1.dtype == x1.dtype
    assert jnp.allclose(out1, ref1, atol=1e-6, rtol=1e-6)

    # --- Test 2: force the Pallas path on a ragged size (pad + slice + bias + sigmoid) ---
    x2 = jax.random.normal(k2, (313, 7), dtype=jnp.float32)
    b2 = jnp.full((1,), 0.25, dtype=jnp.float32)
    out2 = jax.block_until_ready(
        prediction_layer(x2, b2, task='binary', use_bias=True, min_pallas_bytes=0))
    ref2 = jax.nn.sigmoid(x2 + b2[0])
    assert out2.shape == x2.shape and out2.dtype == x2.dtype
    assert jnp.allclose(out2, ref2, atol=1e-6, rtol=1e-6)

    # --- Test 3: Pallas path, lane-dense no-pad slab (total % 1024 == 0), regression ---
    x3 = jax.random.normal(k3, (128, 1024), dtype=jnp.float32)
    out3 = jax.block_until_ready(prediction_layer(x3, b2, task='regression', use_bias=True))
    ref3 = x3 + b2[0]
    assert out3.shape == x3.shape
    assert jnp.allclose(out3, ref3, atol=1e-6, rtol=1e-6)

    # --- Test 4: identity fast path (no bias, no sigmoid) skips all work ---
    x4 = jax.random.normal(k4, (8, 1), dtype=jnp.float32)
    out4 = jax.block_until_ready(prediction_layer(x4, None, task='multiclass', use_bias=False))
    assert jnp.array_equal(out4, x4)

    print("KERNEL_OK")
</pallas_src>

<mosaic_0001>
module attributes {stable_mosaic.version = 11 : i64} {
  func.func @_prediction_kernel(%arg0: i32, %arg1: memref<3x1024xf32, #tpu.memory_space<vmem>>, %arg2: memref<1xf32, #tpu.memory_space<smem>>, %arg3: memref<3x1024xf32, #tpu.memory_space<vmem>>) attributes {dimension_semantics = [#tpu.dimension_semantics<parallel>], iteration_bounds = array<i64: 1>, scalar_prefetch = 0 : i64, scratch_operands = 0 : i64, tpu.core_type = #tpu.core_type<tc>, window_params = [{transform_indices = @transform_0, window_bounds = array<i64: 3, 1024>}, {transform_indices = @transform_1, window_bounds = array<i64: 1>}, {transform_indices = @transform_2, window_bounds = array<i64: 3, 1024>}]} {
    %c0 = arith.constant 0 : index
    %c0_0 = arith.constant 0 : index
    %0 = vector.load %arg1[%c0, %c0_0] : memref<3x1024xf32, #tpu.memory_space<vmem>>, vector<3x1024xf32>
    %c0_1 = arith.constant 0 : index
    %1 = memref.load %arg2[%c0_1] : memref<1xf32, #tpu.memory_space<smem>>
    %2 = vector.broadcast %1 : f32 to vector<3x1024xf32>
    %3 = arith.addf %0, %2 : vector<3x1024xf32>
    %4 = arith.negf %3 : vector<3x1024xf32>
    %5 = math.exp %4 : vector<3x1024xf32>
    %cst = arith.constant 1.000000e+00 : f32
    %6 = vector.broadcast %cst : f32 to vector<3x1024xf32>
    %7 = arith.addf %6, %5 : vector<3x1024xf32>
    %8 = arith.divf %6, %7 : vector<3x1024xf32>
    %c0_2 = arith.constant 0 : index
    %c0_3 = arith.constant 0 : index
    %9 = vector.load %arg3[%c0_2, %c0_3] : memref<3x1024xf32, #tpu.memory_space<vmem>>, vector<3x1024xf32>
    tpu.vector_store %arg3[%c0_2, %c0_3], %8 {strides = array<i32>} : memref<3x1024xf32, #tpu.memory_space<vmem>>, vector<3x1024xf32>,
    return
  }
  func.func @transform_0(%arg0: i32) -> (i32, i32) {
    %c0_i32 = arith.constant 0 : i32
    %c0_i32_0 = arith.constant 0 : i32
    return %arg0, %c0_i32 : i32, i32
  }
  func.func @transform_1(%arg0: i32) -> i32 {
    %c0_i32 = arith.constant 0 : i32
    %c0_i32_0 = arith.constant 0 : i32
    return %c0_i32 : i32
  }
  func.func @transform_2(%arg0: i32) -> (i32, i32) {
    %c0_i32 = arith.constant 0 : i32
    %c0_i32_0 = arith.constant 0 : i32
    return %arg0, %c0_i32 : i32, i32
  }
}

</mosaic_0001>

<llo_original>
// kernel: tpu_custom_call.1
$region0: #{tpu_custom_call.1}
  #allocation0 [shape = 'u32[]', space=smem, size = 0x4, offset = 0x4, fixed_abs, tag = 'smem constant byte address 0x4 - core index']
  #allocation1 [shape = 'u32[144,128]{1,0:T(1,128)}', space=vmem, size = 0x12000, scoped, tag = 'internal scratch']
  #allocation2 [shape = 'f32[1]{0:T(128)S(6)}', space=smem, size = 0x200, scoped, tag = 'scoped memory for tpu_custom_call.1']
  %s0 = inlined_call_operand.hbm [shape: f32[3,1024], index: 0, kind: input, shape index: {}]
  %s1 = inlined_call_operand.<no memory space> [shape: f32[1], index: 1, kind: input, shape index: {}]
  %s2 = inlined_call_operand.hbm [shape: f32[3,1024], index: 2, kind: output, shape index: {}]
  %s3 = sld [smem:[#allocation0]]
  $region22: #{tpu_custom_call.1} parent=0
    _
  %s5 = ssub.s32 1, %s3
  %s6 = scalar_select 0, %s5, %s3
  %7 = sst [smem:[#allocation2]] %s1
  $region1: #{tpu_custom_call.1} parent=0
    #allocation3 [shape = 'u8[16384]{0}', space=vmem, size = 0x4000, scoped, tag = 'input window, operand 0, single buffered']
    #allocation4 [shape = 's32[1]{0}', space=sflag, size = 0x4, scoped, tag = 'scoped memory for tpu_custom_call.1']
    #allocation5 [shape = 's32[1]{0}', space=sflag, size = 0x4, scoped, tag = 'scoped memory for tpu_custom_call.1']
    #allocation6 [shape = 'u8[16384]{0}', space=vmem, size = 0x4000, scoped, tag = 'output window, operand 0, single buffered']
    %8 = vsyncpa [#allocation4], 0
    %9 = vsyncpa [#allocation5], 0
    // Predicated region
    $region2: #{tpu_custom_call.1} parent=1 // pred_check
      _
    $region3: #{tpu_custom_call.1} parent=1 // pred_check_branch
      %11 = sbr.rel (0) target = $region5
    $region4: #{tpu_custom_call.1} parent=1 // pred_region
      %s13 = ssub.s32 512, 512
      %14 = vsyncadd [#allocation4], %s13
      %s16 = sshll.u32 [#allocation3], 4
      %s17 = int_to_ptr.vmem [resolvable:$true] %s16
      %19 = dma.hbm_to_vmem [thread:$0]  %s0, 512, %s17, [#allocation4]
    $region5: #{tpu_custom_call.1} parent=1 // pred_fallthru
      _
    // Predicated region
    $region6: #{tpu_custom_call.1} parent=1 // pred_check
      _
    $region7: #{tpu_custom_call.1} parent=1 // pred_check_branch
      %21 = sbr.rel (0) target = $region9
    $region8: #{tpu_custom_call.1} parent=1 // pred_region
      _
    $region9: #{tpu_custom_call.1} parent=1 // pred_fallthru
      _
    // Predicated region
    $region10: #{tpu_custom_call.1} parent=1 // pred_check
      _
    $region11: #{tpu_custom_call.1} parent=1 // pred_check_branch
      %23 = sbr.rel (0) target = $region13
    $region12: #{tpu_custom_call.1} parent=1 // pred_region
      %24 = dma.done [#allocation4], 512
    $region13: #{tpu_custom_call.1} parent=1 // pred_fallthru
      _
    %v25 = vld [vmem:[#allocation3] sm:$0x77]
    %v26 = vld [vmem:[#allocation3 + $0x8] sm:$0x77]
    %v27 = vld [vmem:[#allocation3 + $0x10] sm:$0x77]
    %v28 = vld [vmem:[#allocation3 + $0x18] sm:$0x77]
    %s29 = sld [smem:[#allocation2]]
    %v30 = vstv %s29
    %v31 = vadd.f32 %v25, %v30
    %v32 = vadd.f32 %v26, %v30
    %v33 = vadd.f32 %v27, %v30
    %v34 = vadd.f32 %v28, %v30
    %v35 = vxor.u32 %v31, 2147483648
    %v36 = vxor.u32 %v32, 2147483648
    %v37 = vxor.u32 %v33, 2147483648
    %v38 = vxor.u32 %v34, 2147483648
    %v39 = vmul.f32 %v35, 1.442695
    %v40 = vpow.pop %v39
    %v41 = vmul.f32 %v36, 1.442695
    %v42 = vpow.pop %v41
    %v43 = vmul.f32 %v37, 1.442695
    %v44 = vpow.pop %v43
    %v45 = vmul.f32 %v38, 1.442695
    %v46 = vpow.pop %v45
    %v47 = vadd.f32 %v40, 1.0
    %v48 = vadd.f32 %v42, 1.0
    %v49 = vadd.f32 %v44, 1.0
    %v50 = vadd.f32 %v46, 1.0
    %v51 = vrcp.pop %v47
    %v52 = vmul.f32 1.0, %v51
    %v53 = vrcp.pop %v48
    %v54 = vmul.f32 1.0, %v53
    %v55 = vrcp.pop %v49
    %v56 = vmul.f32 1.0, %v55
    %v57 = vrcp.pop %v50
    %v58 = vmul.f32 1.0, %v57
    %59 = vst [vmem:[#allocation6] sm:$0x77] %v52
    %60 = vst [vmem:[#allocation6 + $0x8] sm:$0x77] %v54
    %61 = vst [vmem:[#allocation6 + $0x10] sm:$0x77] %v56
    %62 = vst [vmem:[#allocation6 + $0x18] sm:$0x77] %v58
    // Predicated region
    $region14: #{tpu_custom_call.1} parent=1 // pred_check
      _
    $region15: #{tpu_custom_call.1} parent=1 // pred_check_branch
      %64 = sbr.rel (0) target = $region17
    $region16: #{tpu_custom_call.1} parent=1 // pred_region
      %s66 = ssub.s32 512, 512
      %67 = vsyncadd [#allocation5], %s66
      %s69 = sshll.u32 [#allocation6], 4
      %s70 = int_to_ptr.vmem [resolvable:$true] %s69
      %72 = dma.vmem_to_hbm [thread:$0]  %s70, 512, %s2, [#allocation5]
    $region17: #{tpu_custom_call.1} parent=1 // pred_fallthru
      _
    // Predicated region
    $region18: #{tpu_custom_call.1} parent=1 // pred_check
      _
    $region19: #{tpu_custom_call.1} parent=1 // pred_check_branch
      %74 = sbr.rel (0) target = $region21
    $region20: #{tpu_custom_call.1} parent=1 // pred_region
      %75 = dma.done [#allocation5], 512
    $region21: #{tpu_custom_call.1} parent=1 // pred_fallthru
      _
    %76 = vsyncpa [#allocation4], 1
    %77 = vsyncpa [#allocation5], 1

</llo_original>
